<compile_context>
chip_gen: v5e
topology: v5e:2x2
jax: 0.10.0
libtpu: 0.0.40
codegen_flags: <defaults>
</compile_context>

<pallas_src>
import jax
import jax.numpy as jnp
from jax.experimental import pallas as pl
from jax.experimental.pallas import tpu as pltpu


def _round_up(n, m):
    return ((n + m - 1) // m) * m


def _mlp_kernel(x_ref,
                w1_ref, b1_ref,
                w2_ref, b2_ref,
                w3_ref, b3_ref,
                w4_ref, b4_ref,
                o_ref):
    mxu_dtype = w1_ref.dtype  # bf16 matmul operands, f32 accumulate
    # layer 1 + ReLU
    h = jnp.dot(x_ref[...].astype(mxu_dtype), w1_ref[...],
                preferred_element_type=jnp.float32)
    h = jnp.maximum(h + b1_ref[...], 0.0)
    # layer 2 + ReLU
    h = jnp.dot(h.astype(mxu_dtype), w2_ref[...],
                preferred_element_type=jnp.float32)
    h = jnp.maximum(h + b2_ref[...], 0.0)
    # layer 3 + ReLU
    h = jnp.dot(h.astype(mxu_dtype), w3_ref[...],
                preferred_element_type=jnp.float32)
    h = jnp.maximum(h + b3_ref[...], 0.0)
    # output layer (no activation)
    h = jnp.dot(h.astype(mxu_dtype), w4_ref[...],
                preferred_element_type=jnp.float32)
    o_ref[...] = (h + b4_ref[...]).astype(o_ref.dtype)


def prepare_params(params, *, lane=128, matmul_dtype=jnp.bfloat16):
    """One-time (outside the hot path) weight preparation.

    params: dict with 'W1'..'W4' of shape (out, in) (PyTorch convention)
            and 'b1'..'b4' of shape (out,).

    Returns a dict with:
      - w1..w4: [in_pad, out_pad] bf16, transposed + zero-padded to 128-lane
        multiples.
      - b1..b4: [1, out_pad] f32.
    """
    prep = {}
    for i in range(1, 5):
        w = params[f"W{i}"]
        b = params[f"b{i}"]
        out_f, in_f = w.shape
        in_p = _round_up(in_f, lane)
        out_p = _round_up(out_f, lane)
        wt = jnp.zeros((in_p, out_p), jnp.float32).at[:in_f, :out_f].set(w.T)
        bp = jnp.zeros((1, out_p), jnp.float32).at[0, :out_f].set(b)
        prep[f"w{i}"] = wt.astype(matmul_dtype)
        prep[f"b{i}"] = bp
    return prep


def three_layer_network_forward(x, prep, *, out_features, block_m=256):
    """x: [B, ...] (flattened inside, like x.view(x.shape[0], -1)).

    prep: output of prepare_params. out_features/block_m must be static
    (mark them static_argnames under jax.jit).
    """
    B = x.shape[0]
    x2d = x.reshape(B, -1).astype(jnp.float32)
    in_pad = prep["w1"].shape[0]
    out_pad = prep["w4"].shape[1]

    weights = (prep["w1"], prep["b1"], prep["w2"], prep["b2"],
               prep["w3"], prep["b3"], prep["w4"], prep["b4"])

    d0 = in_pad
    d1, d2 = prep["w1"].shape[1], prep["w2"].shape[1]
    d3, d4 = prep["w3"].shape[1], out_pad
    flops = 2 * B * (d0 * d1 + d1 * d2 + d2 * d3 + d3 * d4)
    bytes_accessed = (B * d0 * 4 + B * d4 * 4
                      + sum(int(w.size) * w.dtype.itemsize for w in weights))
    cost = pl.CostEstimate(flops=flops, transcendentals=0,
                           bytes_accessed=bytes_accessed)

    if B <= block_m:
        # Small batch: single full-extent fused block; pad rows to a sublane
        # multiple so both the x load and the output store are unmasked.
        bp = _round_up(B, 8)
        pad_rows = bp - B
        pad_cols = in_pad - x2d.shape[1]
        if pad_rows or pad_cols:
            x2d = jnp.pad(x2d, ((0, pad_rows), (0, pad_cols)))
        full = lambda a: pl.BlockSpec(a.shape, lambda: (0,) * a.ndim)
        out = pl.pallas_call(
            _mlp_kernel,
            out_shape=jax.ShapeDtypeStruct((bp, out_pad), jnp.float32),
            in_specs=[full(x2d)] + [full(w) for w in weights],
            out_specs=pl.BlockSpec((bp, out_pad), lambda: (0, 0)),
            cost_estimate=cost,
        )(x2d, *weights)
        return out[:B, :out_features]

    # Large batch: grid over the batch axis. Weight/bias BlockSpecs are
    # full-extent with constant index maps, so they stay VMEM resident across
    # grid steps (no re-DMA); only x / out stream per step.
    bp = _round_up(B, block_m)
    pad_rows = bp - B
    pad_cols = in_pad - x2d.shape[1]
    if pad_rows or pad_cols:
        x2d = jnp.pad(x2d, ((0, pad_rows), (0, pad_cols)))
    resident = lambda a: pl.BlockSpec(a.shape, lambda i, n=a.ndim: (0,) * n)
    out = pl.pallas_call(
        _mlp_kernel,
        out_shape=jax.ShapeDtypeStruct((bp, out_pad), jnp.float32),
        grid=(bp // block_m,),
        in_specs=[pl.BlockSpec((block_m, in_pad), lambda i: (i, 0))]
                 + [resident(w) for w in weights],
        out_specs=pl.BlockSpec((block_m, out_pad), lambda i: (i, 0)),
        compiler_params=pltpu.CompilerParams(
            dimension_semantics=("parallel",)),
        cost_estimate=cost,
    )(x2d, *weights)
    return out[:B, :out_features]


def _reference_forward(x, params):
    B = x.shape[0]
    h = x.reshape(B, -1).astype(jnp.float32)
    h = jnp.maximum(h @ params["W1"].T + params["b1"], 0.0)
    h = jnp.maximum(h @ params["W2"].T + params["b2"], 0.0)
    h = jnp.maximum(h @ params["W3"].T + params["b3"], 0.0)
    return h @ params["W4"].T + params["b4"]


def _init_params(key, in_features, hidden_features, out_features):
    """Deterministic synthetic init (PyTorch-like uniform fan-in scaling)."""
    dims = [in_features] + list(hidden_features) + [out_features]
    params = {}
    for i in range(4):
        fan_in, fan_out = dims[i], dims[i + 1]
        key, kw, kb = jax.random.split(key, 3)
        bound = 1.0 / (fan_in ** 0.5)
        params[f"W{i + 1}"] = jax.random.uniform(
            kw, (fan_out, fan_in), jnp.float32, -bound, bound)
        params[f"b{i + 1}"] = jax.random.uniform(
            kb, (fan_out,), jnp.float32, -bound, bound)
    return params


if __name__ == "__main__":
    key = jax.random.PRNGKey(0)
    kx, kp = jax.random.split(key)

    # Input consistent with forward's x.view(x.shape[0], -1): an NCHW image
    # batch that gets flattened to [B, C*H*W].
    B, C, H, W = 2, 4, 16, 16
    x = jax.random.normal(kx, (B, C, H, W), jnp.float32)

    in_features = C * H * W            # 1024
    hidden_features = [32, 64, 32]
    out_features = 8

    params = _init_params(kp, in_features, hidden_features, out_features)
    prep = prepare_params(params)      # one-time: transpose + pad + bf16 cast

    fwd = jax.jit(three_layer_network_forward,
                  static_argnames=("out_features", "block_m"))

    # Small-batch (no-grid) path.
    out = fwd(x, prep, out_features=out_features)
    out = jax.block_until_ready(out)
    ref = _reference_forward(x, params)
    assert out.shape == (B, out_features)
    assert jnp.allclose(out, ref, atol=5e-2, rtol=5e-2), "mismatch (small batch)"

    # Batch-grid path (weights VMEM-resident across grid steps).
    B2 = 384
    x2 = jax.random.normal(kx, (B2, C, H, W), jnp.float32)
    out2 = fwd(x2, prep, out_features=out_features, block_m=128)
    out2 = jax.block_until_ready(out2)
    ref2 = _reference_forward(x2, params)
    assert out2.shape == (B2, out_features)
    assert jnp.allclose(out2, ref2, atol=5e-2, rtol=5e-2), "mismatch (batch grid)"

    print("KERNEL_OK")
</pallas_src>

<mosaic_0001>
module attributes {stable_mosaic.version = 11 : i64} {
  func.func @_mlp_kernel(%arg0: memref<8x1024xf32, #tpu.memory_space<vmem>>, %arg1: memref<1024x128xbf16, #tpu.memory_space<vmem>>, %arg2: memref<1x128xf32, #tpu.memory_space<vmem>>, %arg3: memref<128x128xbf16, #tpu.memory_space<vmem>>, %arg4: memref<1x128xf32, #tpu.memory_space<vmem>>, %arg5: memref<128x128xbf16, #tpu.memory_space<vmem>>, %arg6: memref<1x128xf32, #tpu.memory_space<vmem>>, %arg7: memref<128x128xbf16, #tpu.memory_space<vmem>>, %arg8: memref<1x128xf32, #tpu.memory_space<vmem>>, %arg9: memref<8x128xf32, #tpu.memory_space<vmem>>) attributes {dimension_semantics = [], scalar_prefetch = 0 : i64, scratch_operands = 0 : i64, tpu.core_type = #tpu.core_type<tc>} {
    %c0 = arith.constant 0 : index
    %c0_0 = arith.constant 0 : index
    %0 = vector.load %arg0[%c0, %c0_0] : memref<8x1024xf32, #tpu.memory_space<vmem>>, vector<8x1024xf32>
    %1 = arith.truncf %0 : vector<8x1024xf32> to vector<8x1024xbf16>
    %c0_1 = arith.constant 0 : index
    %c0_2 = arith.constant 0 : index
    %2 = vector.load %arg1[%c0_1, %c0_2] : memref<1024x128xbf16, #tpu.memory_space<vmem>>, vector<1024x128xbf16>
    %cst = arith.constant dense<0.000000e+00> : vector<8x128xf32>
    %3 = tpu.matmul %1, %2, %cst {dimension_numbers = #tpu.dot_dimension_numbers<[1], [0], [0], [1], [0, 0, 1, 1], [], []>} : vector<8x1024xbf16>, vector<1024x128xbf16>, vector<8x128xf32> -> vector<8x128xf32>
    %c0_3 = arith.constant 0 : index
    %c0_4 = arith.constant 0 : index
    %4 = vector.load %arg2[%c0_3, %c0_4] : memref<1x128xf32, #tpu.memory_space<vmem>>, vector<1x128xf32>
    %5 = vector.broadcast %4 : vector<1x128xf32> to vector<8x128xf32>
    %6 = arith.addf %3, %5 : vector<8x128xf32>
    %cst_5 = arith.constant 0.000000e+00 : f32
    %7 = vector.broadcast %cst_5 : f32 to vector<8x128xf32>
    %8 = arith.maximumf %6, %7 : vector<8x128xf32>
    %9 = arith.truncf %8 : vector<8x128xf32> to vector<8x128xbf16>
    %c0_6 = arith.constant 0 : index
    %c0_7 = arith.constant 0 : index
    %10 = vector.load %arg3[%c0_6, %c0_7] : memref<128x128xbf16, #tpu.memory_space<vmem>>, vector<128x128xbf16>
    %cst_8 = arith.constant dense<0.000000e+00> : vector<8x128xf32>
    %11 = tpu.matmul %9, %10, %cst_8 {dimension_numbers = #tpu.dot_dimension_numbers<[1], [0], [0], [1], [0, 0, 1, 1], [], []>} : vector<8x128xbf16>, vector<128x128xbf16>, vector<8x128xf32> -> vector<8x128xf32>
    %c0_9 = arith.constant 0 : index
    %c0_10 = arith.constant 0 : index
    %12 = vector.load %arg4[%c0_9, %c0_10] : memref<1x128xf32, #tpu.memory_space<vmem>>, vector<1x128xf32>
    %13 = vector.broadcast %12 : vector<1x128xf32> to vector<8x128xf32>
    %14 = arith.addf %11, %13 : vector<8x128xf32>
    %cst_11 = arith.constant 0.000000e+00 : f32
    %15 = vector.broadcast %cst_11 : f32 to vector<8x128xf32>
    %16 = arith.maximumf %14, %15 : vector<8x128xf32>
    %17 = arith.truncf %16 : vector<8x128xf32> to vector<8x128xbf16>
    %c0_12 = arith.constant 0 : index
    %c0_13 = arith.constant 0 : index
    %18 = vector.load %arg5[%c0_12, %c0_13] : memref<128x128xbf16, #tpu.memory_space<vmem>>, vector<128x128xbf16>
    %cst_14 = arith.constant dense<0.000000e+00> : vector<8x128xf32>
    %19 = tpu.matmul %17, %18, %cst_14 {dimension_numbers = #tpu.dot_dimension_numbers<[1], [0], [0], [1], [0, 0, 1, 1], [], []>} : vector<8x128xbf16>, vector<128x128xbf16>, vector<8x128xf32> -> vector<8x128xf32>
    %c0_15 = arith.constant 0 : index
    %c0_16 = arith.constant 0 : index
    %20 = vector.load %arg6[%c0_15, %c0_16] : memref<1x128xf32, #tpu.memory_space<vmem>>, vector<1x128xf32>
    %21 = vector.broadcast %20 : vector<1x128xf32> to vector<8x128xf32>
    %22 = arith.addf %19, %21 : vector<8x128xf32>
    %cst_17 = arith.constant 0.000000e+00 : f32
    %23 = vector.broadcast %cst_17 : f32 to vector<8x128xf32>
    %24 = arith.maximumf %22, %23 : vector<8x128xf32>
    %25 = arith.truncf %24 : vector<8x128xf32> to vector<8x128xbf16>
    %c0_18 = arith.constant 0 : index
    %c0_19 = arith.constant 0 : index
    %26 = vector.load %arg7[%c0_18, %c0_19] : memref<128x128xbf16, #tpu.memory_space<vmem>>, vector<128x128xbf16>
    %cst_20 = arith.constant dense<0.000000e+00> : vector<8x128xf32>
    %27 = tpu.matmul %25, %26, %cst_20 {dimension_numbers = #tpu.dot_dimension_numbers<[1], [0], [0], [1], [0, 0, 1, 1], [], []>} : vector<8x128xbf16>, vector<128x128xbf16>, vector<8x128xf32> -> vector<8x128xf32>
    %c0_21 = arith.constant 0 : index
    %c0_22 = arith.constant 0 : index
    %28 = vector.load %arg8[%c0_21, %c0_22] : memref<1x128xf32, #tpu.memory_space<vmem>>, vector<1x128xf32>
    %29 = vector.broadcast %28 : vector<1x128xf32> to vector<8x128xf32>
    %30 = arith.addf %27, %29 : vector<8x128xf32>
    %c0_23 = arith.constant 0 : index
    %c0_24 = arith.constant 0 : index
    %31 = vector.load %arg9[%c0_23, %c0_24] : memref<8x128xf32, #tpu.memory_space<vmem>>, vector<8x128xf32>
    tpu.vector_store %arg9[%c0_23, %c0_24], %30 {strides = array<i32>} : memref<8x128xf32, #tpu.memory_space<vmem>>, vector<8x128xf32>,
    return
  }
}

</mosaic_0001>

<llo_original>
// kernel: three_layer_network_forward.1
$region0: #{three_layer_network_forward.1}
  #allocation0 [shape = 'u32[]', space=smem, size = 0x4, offset = 0x4, fixed_abs, tag = 'smem constant byte address 0x4 - core index']
  #allocation1 [shape = 'u32[72,128]{1,0:T(1,128)}', space=vmem, size = 0x9000, scoped, tag = 'internal scratch']
  %s0 = inlined_call_operand.vmem [shape: f32[8,1024], index: 0, kind: input, shape index: {}]
  %s1 = inlined_call_operand.hbm [shape: bf16[1024,128], index: 1, kind: input, shape index: {}]
  %s2 = inlined_call_operand.vmem [shape: f32[1,128], index: 2, kind: input, shape index: {}]
  %s3 = inlined_call_operand.vmem [shape: bf16[128,128], index: 3, kind: input, shape index: {}]
  %s4 = inlined_call_operand.vmem [shape: f32[1,128], index: 4, kind: input, shape index: {}]
  %s5 = inlined_call_operand.vmem [shape: bf16[128,128], index: 5, kind: input, shape index: {}]
  %s6 = inlined_call_operand.vmem [shape: f32[1,128], index: 6, kind: input, shape index: {}]
  %s7 = inlined_call_operand.vmem [shape: bf16[128,128], index: 7, kind: input, shape index: {}]
  %s8 = inlined_call_operand.vmem [shape: f32[1,128], index: 8, kind: input, shape index: {}]
  %s9 = inlined_call_operand.vmem [shape: f32[8,128], index: 9, kind: output, shape index: {}]
  %s10 = sld [smem:[#allocation0]]
  $region50: #{three_layer_network_forward.1} parent=0
    _
  %s12 = ssub.s32 1, %s10
  %s13 = scalar_select 0, %s12, %s10
  $region1: #{three_layer_network_forward.1} parent=0
    #allocation2 [shape = 'u8[262144]{0}', space=vmem, size = 0x40000, scoped, tag = 'input window, operand 1, single buffered']
    #allocation3 [shape = 's32[1]{0}', space=sflag, size = 0x4, scoped, tag = 'scoped memory for three_layer_network_forward.1']
    %14 = vsyncpa [#allocation3], 0
    // Predicated region
    $region2: #{three_layer_network_forward.1} parent=1 // pred_check
      _
    $region3: #{three_layer_network_forward.1} parent=1 // pred_check_branch
      %16 = sbr.rel (0) target = $region5
    $region4: #{three_layer_network_forward.1} parent=1 // pred_region
      _
    $region5: #{three_layer_network_forward.1} parent=1 // pred_fallthru
      _
    // Predicated region
    $region6: #{three_layer_network_forward.1} parent=1 // pred_check
      _
    $region7: #{three_layer_network_forward.1} parent=1 // pred_check_branch
      %18 = sbr.rel (0) target = $region9
    $region8: #{three_layer_network_forward.1} parent=1 // pred_region
      %20 = vsyncadd [#allocation3], 0
      %s21 = sshll.u32 %s1, 4
      %s22 = int_to_ptr.hbm [resolvable:$true] %s21
      %s23 = sshll.u32 [#allocation2], 4
      %s24 = int_to_ptr.vmem [resolvable:$true] %s23
      %29 = dma.hbm_to_vmem [thread:$0]  %s22, 8192, %s24, [#allocation3], 64, 64, 4
    $region9: #{three_layer_network_forward.1} parent=1 // pred_fallthru
      _
    // Predicated region
    $region10: #{three_layer_network_forward.1} parent=1 // pred_check
      _
    $region11: #{three_layer_network_forward.1} parent=1 // pred_check_branch
      %31 = sbr.rel (0) target = $region13
    $region12: #{three_layer_network_forward.1} parent=1 // pred_region
      _
    $region13: #{three_layer_network_forward.1} parent=1 // pred_fallthru
      _
    // Predicated region
    $region14: #{three_layer_network_forward.1} parent=1 // pred_check
      _
    $region15: #{three_layer_network_forward.1} parent=1 // pred_check_branch
      %33 = sbr.rel (0) target = $region17
    $region16: #{three_layer_network_forward.1} parent=1 // pred_region
      _
    $region17: #{three_layer_network_forward.1} parent=1 // pred_fallthru
      _
    // Predicated region
    $region18: #{three_layer_network_forward.1} parent=1 // pred_check
      _
    $region19: #{three_layer_network_forward.1} parent=1 // pred_check_branch
      %35 = sbr.rel (0) target = $region21
    $region20: #{three_layer_network_forward.1} parent=1 // pred_region
      _
    $region21: #{three_layer_network_forward.1} parent=1 // pred_fallthru
      _
    // Predicated region
    $region22: #{three_layer_network_forward.1} parent=1 // pred_check
      _
    $region23: #{three_layer_network_forward.1} parent=1 // pred_check_branch
      %37 = sbr.rel (0) target = $region25
    $region24: #{three_layer_network_forward.1} parent=1 // pred_region
      _
    $region25: #{three_layer_network_forward.1} parent=1 // pred_fallthru
      _
    // Predicated region
    $region26: #{three_layer_network_forward.1} parent=1 // pred_check
      _
    $region27: #{three_layer_network_forward.1} parent=1 // pred_check_branch
      %39 = sbr.rel (0) target = $region29
    $region28: #{three_layer_network_forward.1} parent=1 // pred_region
      _
    $region29: #{three_layer_network_forward.1} parent=1 // pred_fallthru
      _
    // Predicated region
    $region30: #{three_layer_network_forward.1} parent=1 // pred_check
      _
    $region31: #{three_layer_network_forward.1} parent=1 // pred_check_branch
      %41 = sbr.rel (0) target = $region33
    $region32: #{three_layer_network_forward.1} parent=1 // pred_region
      _
    $region33: #{three_layer_network_forward.1} parent=1 // pred_fallthru
      _
    // Predicated region
    $region34: #{three_layer_network_forward.1} parent=1 // pred_check
      _
    $region35: #{three_layer_network_forward.1} parent=1 // pred_check_branch
      %43 = sbr.rel (0) target = $region37
    $region36: #{three_layer_network_forward.1} parent=1 // pred_region
      _
    $region37: #{three_layer_network_forward.1} parent=1 // pred_fallthru
      _
    // Predicated region
    $region38: #{three_layer_network_forward.1} parent=1 // pred_check
      _
    $region39: #{three_layer_network_forward.1} parent=1 // pred_check_branch
      %45 = sbr.rel (0) target = $region41
    $region40: #{three_layer_network_forward.1} parent=1 // pred_region
      %47 = dma.done [#allocation3], 8192
    $region41: #{three_layer_network_forward.1} parent=1 // pred_fallthru
      _
    %v48 = vld [vmem:[%s0] sm:$0xff]
    %v49 = vld [vmem:[%s0 + $0x8] sm:$0xff]
    %v50 = vld [vmem:[%s0 + $0x10] sm:$0xff]
    %v51 = vld [vmem:[%s0 + $0x18] sm:$0xff]
    %v52 = vld [vmem:[%s0 + $0x20] sm:$0xff]
    %v53 = vld [vmem:[%s0 + $0x28] sm:$0xff]
    %v54 = vld [vmem:[%s0 + $0x30] sm:$0xff]
    %v55 = vld [vmem:[%s0 + $0x38] sm:$0xff]
    %v56 = vpack.c.bf16 %v48, %v48
    %v57 = vpack.c.bf16 %v49, %v49
    %v58 = vpack.c.bf16 %v50, %v50
    %v59 = vpack.c.bf16 %v51, %v51
    %v60 = vpack.c.bf16 %v52, %v52
    %v61 = vpack.c.bf16 %v53, %v53
    %v62 = vpack.c.bf16 %v54, %v54
    %v63 = vpack.c.bf16 %v55, %v55
    %v64 = vld [vmem:[#allocation2] sm:$0xf]
    %v65 = vld [vmem:[#allocation2 + $0x4] sm:$0xf]
    %v66 = vld [vmem:[#allocation2 + $0x8] sm:$0xf]
    %v67 = vld [vmem:[#allocation2 + $0xc] sm:$0xf]
    %v68 = vld [vmem:[#allocation2 + $0x10] sm:$0xf]
    %v69 = vld [vmem:[#allocation2 + $0x14] sm:$0xf]
    %v70 = vld [vmem:[#allocation2 + $0x18] sm:$0xf]
    %v71 = vld [vmem:[#allocation2 + $0x1c] sm:$0xf]
    %v72 = vld [vmem:[#allocation2 + $0x20] sm:$0xf]
    %v73 = vld [vmem:[#allocation2 + $0x24] sm:$0xf]
    %v74 = vld [vmem:[#allocation2 + $0x28] sm:$0xf]
    %v75 = vld [vmem:[#allocation2 + $0x2c] sm:$0xf]
    %v76 = vld [vmem:[#allocation2 + $0x30] sm:$0xf]
    %v77 = vld [vmem:[#allocation2 + $0x34] sm:$0xf]
    %v78 = vld [vmem:[#allocation2 + $0x38] sm:$0xf]
    %v79 = vld [vmem:[#allocation2 + $0x3c] sm:$0xf]
    %v80 = vld [vmem:[#allocation2 + $0x40] sm:$0xf]
    %v81 = vld [vmem:[#allocation2 + $0x44] sm:$0xf]
    %v82 = vld [vmem:[#allocation2 + $0x48] sm:$0xf]
    %v83 = vld [vmem:[#allocation2 + $0x4c] sm:$0xf]
    %v84 = vld [vmem:[#allocation2 + $0x50] sm:$0xf]
    %v85 = vld [vmem:[#allocation2 + $0x54] sm:$0xf]
    %v86 = vld [vmem:[#allocation2 + $0x58] sm:$0xf]
    %v87 = vld [vmem:[#allocation2 + $0x5c] sm:$0xf]
    %v88 = vld [vmem:[#allocation2 + $0x60] sm:$0xf]
    %v89 = vld [vmem:[#allocation2 + $0x64] sm:$0xf]
    %v90 = vld [vmem:[#allocation2 + $0x68] sm:$0xf]
    %v91 = vld [vmem:[#allocation2 + $0x6c] sm:$0xf]
    %v92 = vld [vmem:[#allocation2 + $0x70] sm:$0xf]
    %v93 = vld [vmem:[#allocation2 + $0x74] sm:$0xf]
    %v94 = vld [vmem:[#allocation2 + $0x78] sm:$0xf]
    %v95 = vld [vmem:[#allocation2 + $0x7c] sm:$0xf]
    %v96 = vld [vmem:[#allocation2 + $0x80] sm:$0xf]
    %v97 = vld [vmem:[#allocation2 + $0x84] sm:$0xf]
    %v98 = vld [vmem:[#allocation2 + $0x88] sm:$0xf]
    %v99 = vld [vmem:[#allocation2 + $0x8c] sm:$0xf]
    %v100 = vld [vmem:[#allocation2 + $0x90] sm:$0xf]
    %v101 = vld [vmem:[#allocation2 + $0x94] sm:$0xf]
    %v102 = vld [vmem:[#allocation2 + $0x98] sm:$0xf]
    %v103 = vld [vmem:[#allocation2 + $0x9c] sm:$0xf]
    %v104 = vld [vmem:[#allocation2 + $0xa0] sm:$0xf]
    %v105 = vld [vmem:[#allocation2 + $0xa4] sm:$0xf]
    %v106 = vld [vmem:[#allocation2 + $0xa8] sm:$0xf]
    %v107 = vld [vmem:[#allocation2 + $0xac] sm:$0xf]
    %v108 = vld [vmem:[#allocation2 + $0xb0] sm:$0xf]
    %v109 = vld [vmem:[#allocation2 + $0xb4] sm:$0xf]
    %v110 = vld [vmem:[#allocation2 + $0xb8] sm:$0xf]
    %v111 = vld [vmem:[#allocation2 + $0xbc] sm:$0xf]
    %v112 = vld [vmem:[#allocation2 + $0xc0] sm:$0xf]
    %v113 = vld [vmem:[#allocation2 + $0xc4] sm:$0xf]
    %v114 = vld [vmem:[#allocation2 + $0xc8] sm:$0xf]
    %v115 = vld [vmem:[#allocation2 + $0xcc] sm:$0xf]
    %v116 = vld [vmem:[#allocation2 + $0xd0] sm:$0xf]
    %v117 = vld [vmem:[#allocation2 + $0xd4] sm:$0xf]
    %v118 = vld [vmem:[#allocation2 + $0xd8] sm:$0xf]
    %v119 = vld [vmem:[#allocation2 + $0xdc] sm:$0xf]
    %v120 = vld [vmem:[#allocation2 + $0xe0] sm:$0xf]
    %v121 = vld [vmem:[#allocation2 + $0xe4] sm:$0xf]
    %v122 = vld [vmem:[#allocation2 + $0xe8] sm:$0xf]
    %v123 = vld [vmem:[#allocation2 + $0xec] sm:$0xf]
    %v124 = vld [vmem:[#allocation2 + $0xf0] sm:$0xf]
    %v125 = vld [vmem:[#allocation2 + $0xf4] sm:$0xf]
    %v126 = vld [vmem:[#allocation2 + $0xf8] sm:$0xf]
    %v127 = vld [vmem:[#allocation2 + $0xfc] sm:$0xf]
    %v128 = vld [vmem:[#allocation2 + $0x100] sm:$0xf]
    %v129 = vld [vmem:[#allocation2 + $0x104] sm:$0xf]
    %v130 = vld [vmem:[#allocation2 + $0x108] sm:$0xf]
    %v131 = vld [vmem:[#allocation2 + $0x10c] sm:$0xf]
    %v132 = vld [vmem:[#allocation2 + $0x110] sm:$0xf]
    %v133 = vld [vmem:[#allocation2 + $0x114] sm:$0xf]
    %v134 = vld [vmem:[#allocation2 + $0x118] sm:$0xf]
    %v135 = vld [vmem:[#allocation2 + $0x11c] sm:$0xf]
    %v136 = vld [vmem:[#allocation2 + $0x120] sm:$0xf]
    %v137 = vld [vmem:[#allocation2 + $0x124] sm:$0xf]
    %v138 = vld [vmem:[#allocation2 + $0x128] sm:$0xf]
    %v139 = vld [vmem:[#allocation2 + $0x12c] sm:$0xf]
    %v140 = vld [vmem:[#allocation2 + $0x130] sm:$0xf]
    %v141 = vld [vmem:[#allocation2 + $0x134] sm:$0xf]
    %v142 = vld [vmem:[#allocation2 + $0x138] sm:$0xf]
    %v143 = vld [vmem:[#allocation2 + $0x13c] sm:$0xf]
    %v144 = vld [vmem:[#allocation2 + $0x140] sm:$0xf]
    %v145 = vld [vmem:[#allocation2 + $0x144] sm:$0xf]
    %v146 = vld [vmem:[#allocation2 + $0x148] sm:$0xf]
    %v147 = vld [vmem:[#allocation2 + $0x14c] sm:$0xf]
    %v148 = vld [vmem:[#allocation2 + $0x150] sm:$0xf]
    %v149 = vld [vmem:[#allocation2 + $0x154] sm:$0xf]
    %v150 = vld [vmem:[#allocation2 + $0x158] sm:$0xf]
    %v151 = vld [vmem:[#allocation2 + $0x15c] sm:$0xf]
    %v152 = vld [vmem:[#allocation2 + $0x160] sm:$0xf]
    %v153 = vld [vmem:[#allocation2 + $0x164] sm:$0xf]
    %v154 = vld [vmem:[#allocation2 + $0x168] sm:$0xf]
    %v155 = vld [vmem:[#allocation2 + $0x16c] sm:$0xf]
    %v156 = vld [vmem:[#allocation2 + $0x170] sm:$0xf]
    %v157 = vld [vmem:[#allocation2 + $0x174] sm:$0xf]
    %v158 = vld [vmem:[#allocation2 + $0x178] sm:$0xf]
    %v159 = vld [vmem:[#allocation2 + $0x17c] sm:$0xf]
    %v160 = vld [vmem:[#allocation2 + $0x180] sm:$0xf]
    %v161 = vld [vmem:[#allocation2 + $0x184] sm:$0xf]
    %v162 = vld [vmem:[#allocation2 + $0x188] sm:$0xf]
    %v163 = vld [vmem:[#allocation2 + $0x18c] sm:$0xf]
    %v164 = vld [vmem:[#allocation2 + $0x190] sm:$0xf]
    %v165 = vld [vmem:[#allocation2 + $0x194] sm:$0xf]
    %v166 = vld [vmem:[#allocation2 + $0x198] sm:$0xf]
    %v167 = vld [vmem:[#allocation2 + $0x19c] sm:$0xf]
    %v168 = vld [vmem:[#allocation2 + $0x1a0] sm:$0xf]
    %v169 = vld [vmem:[#allocation2 + $0x1a4] sm:$0xf]
    %v170 = vld [vmem:[#allocation2 + $0x1a8] sm:$0xf]
    %v171 = vld [vmem:[#allocation2 + $0x1ac] sm:$0xf]
    %v172 = vld [vmem:[#allocation2 + $0x1b0] sm:$0xf]
    %v173 = vld [vmem:[#allocation2 + $0x1b4] sm:$0xf]
    %v174 = vld [vmem:[#allocation2 + $0x1b8] sm:$0xf]
    %v175 = vld [vmem:[#allocation2 + $0x1bc] sm:$0xf]
    %v176 = vld [vmem:[#allocation2 + $0x1c0] sm:$0xf]
    %v177 = vld [vmem:[#allocation2 + $0x1c4] sm:$0xf]
    %v178 = vld [vmem:[#allocation2 + $0x1c8] sm:$0xf]
    %v179 = vld [vmem:[#allocation2 + $0x1cc] sm:$0xf]
    %v180 = vld [vmem:[#allocation2 + $0x1d0] sm:$0xf]
    %v181 = vld [vmem:[#allocation2 + $0x1d4] sm:$0xf]
    %v182 = vld [vmem:[#allocation2 + $0x1d8] sm:$0xf]
    %v183 = vld [vmem:[#allocation2 + $0x1dc] sm:$0xf]
    %v184 = vld [vmem:[#allocation2 + $0x1e0] sm:$0xf]
    %v185 = vld [vmem:[#allocation2 + $0x1e4] sm:$0xf]
    %v186 = vld [vmem:[#allocation2 + $0x1e8] sm:$0xf]
    %v187 = vld [vmem:[#allocation2 + $0x1ec] sm:$0xf]
    %v188 = vld [vmem:[#allocation2 + $0x1f0] sm:$0xf]
    %v189 = vld [vmem:[#allocation2 + $0x1f4] sm:$0xf]
    %v190 = vld [vmem:[#allocation2 + $0x1f8] sm:$0xf]
    %v191 = vld [vmem:[#allocation2 + $0x1fc] sm:$0xf]
    %v192 = vld [vmem:[%s2] sm:$0x1]
    %v194 = vperm.slane %v192, 0
    %v324 = vunpack.c.l.b16 %v64
    %v325 = vunpack.c.l.b16 %v65
    %v326 = vunpack.c.l.b16 %v66
    %v327 = vunpack.c.l.b16 %v67
    %v328 = vunpack.c.l.b16 %v68
    %v329 = vunpack.c.l.b16 %v69
    %v330 = vunpack.c.l.b16 %v70
    %v331 = vunpack.c.l.b16 %v71
    %v332 = vunpack.c.l.b16 %v72
    %v333 = vunpack.c.l.b16 %v73
    %v334 = vunpack.c.l.b16 %v74
    %v335 = vunpack.c.l.b16 %v75
    %v336 = vunpack.c.l.b16 %v76
    %v337 = vunpack.c.l.b16 %v77
    %v338 = vunpack.c.l.b16 %v78
    %v339 = vunpack.c.l.b16 %v79
    %v340 = vunpack.c.l.b16 %v80
    %v341 = vunpack.c.l.b16 %v81
    %v342 = vunpack.c.l.b16 %v82
    %v343 = vunpack.c.l.b16 %v83
    %v344 = vunpack.c.l.b16 %v84
    %v345 = vunpack.c.l.b16 %v85
    %v346 = vunpack.c.l.b16 %v86
    %v347 = vunpack.c.l.b16 %v87
    %v348 = vunpack.c.l.b16 %v88
    %v349 = vunpack.c.l.b16 %v89
    %v350 = vunpack.c.l.b16 %v90
    %v351 = vunpack.c.l.b16 %v91
    %v352 = vunpack.c.l.b16 %v92
    %v353 = vunpack.c.l.b16 %v93
    %v354 = vunpack.c.l.b16 %v94
    %v355 = vunpack.c.l.b16 %v95
    %v356 = vunpack.c.l.b16 %v96
    %v357 = vunpack.c.l.b16 %v97
    %v358 = vunpack.c.l.b16 %v98
    %v359 = vunpack.c.l.b16 %v99
    %v360 = vunpack.c.l.b16 %v100
    %v361 = vunpack.c.l.b16 %v101
    %v362 = vunpack.c.l.b16 %v102
    %v363 = vunpack.c.l.b16 %v103
    %v364 = vunpack.c.l.b16 %v104
    %v365 = vunpack.c.l.b16 %v105
    %v366 = vunpack.c.l.b16 %v106
    %v367 = vunpack.c.l.b16 %v107
    %v368 = vunpack.c.l.b16 %v108
    %v369 = vunpack.c.l.b16 %v109
    %v370 = vunpack.c.l.b16 %v110
    %v371 = vunpack.c.l.b16 %v111
    %v372 = vunpack.c.l.b16 %v112
    %v373 = vunpack.c.l.b16 %v113
    %v374 = vunpack.c.l.b16 %v114
    %v375 = vunpack.c.l.b16 %v115
    %v376 = vunpack.c.l.b16 %v116
    %v377 = vunpack.c.l.b16 %v117
    %v378 = vunpack.c.l.b16 %v118
    %v379 = vunpack.c.l.b16 %v119
    %v380 = vunpack.c.l.b16 %v120
    %v381 = vunpack.c.l.b16 %v121
    %v382 = vunpack.c.l.b16 %v122
    %v383 = vunpack.c.l.b16 %v123
    %v384 = vunpack.c.l.b16 %v124
    %v385 = vunpack.c.l.b16 %v125
    %v386 = vunpack.c.l.b16 %v126
    %v387 = vunpack.c.l.b16 %v127
    %v388 = vunpack.c.l.b16 %v128
    %v389 = vunpack.c.l.b16 %v129
    %v390 = vunpack.c.l.b16 %v130
    %v391 = vunpack.c.l.b16 %v131
    %v392 = vunpack.c.l.b16 %v132
    %v393 = vunpack.c.l.b16 %v133
    %v394 = vunpack.c.l.b16 %v134
    %v395 = vunpack.c.l.b16 %v135
    %v396 = vunpack.c.l.b16 %v136
    %v397 = vunpack.c.l.b16 %v137
    %v398 = vunpack.c.l.b16 %v138
    %v399 = vunpack.c.l.b16 %v139
    %v400 = vunpack.c.l.b16 %v140
    %v401 = vunpack.c.l.b16 %v141
    %v402 = vunpack.c.l.b16 %v142
    %v403 = vunpack.c.l.b16 %v143
    %v404 = vunpack.c.l.b16 %v144
    %v405 = vunpack.c.l.b16 %v145
    %v406 = vunpack.c.l.b16 %v146
    %v407 = vunpack.c.l.b16 %v147
    %v408 = vunpack.c.l.b16 %v148
    %v409 = vunpack.c.l.b16 %v149
    %v410 = vunpack.c.l.b16 %v150
    %v411 = vunpack.c.l.b16 %v151
    %v412 = vunpack.c.l.b16 %v152
    %v413 = vunpack.c.l.b16 %v153
    %v414 = vunpack.c.l.b16 %v154
    %v415 = vunpack.c.l.b16 %v155
    %v416 = vunpack.c.l.b16 %v156
    %v417 = vunpack.c.l.b16 %v157
    %v418 = vunpack.c.l.b16 %v158
    %v419 = vunpack.c.l.b16 %v159
    %v420 = vunpack.c.l.b16 %v160
    %v421 = vunpack.c.l.b16 %v161
    %v422 = vunpack.c.l.b16 %v162
    %v423 = vunpack.c.l.b16 %v163
    %v424 = vunpack.c.l.b16 %v164
    %v425 = vunpack.c.l.b16 %v165
    %v426 = vunpack.c.l.b16 %v166
    %v427 = vunpack.c.l.b16 %v167
    %v428 = vunpack.c.l.b16 %v168
    %v429 = vunpack.c.l.b16 %v169
    %v430 = vunpack.c.l.b16 %v170
    %v431 = vunpack.c.l.b16 %v171
    %v432 = vunpack.c.l.b16 %v172
    %v433 = vunpack.c.l.b16 %v173
    %v434 = vunpack.c.l.b16 %v174
    %v435 = vunpack.c.l.b16 %v175
    %v436 = vunpack.c.l.b16 %v176
    %v437 = vunpack.c.l.b16 %v177
    %v438 = vunpack.c.l.b16 %v178
    %v439 = vunpack.c.l.b16 %v179
    %v440 = vunpack.c.l.b16 %v180
    %v441 = vunpack.c.l.b16 %v181
    %v442 = vunpack.c.l.b16 %v182
    %v443 = vunpack.c.l.b16 %v183
    %v444 = vunpack.c.l.b16 %v184
    %v445 = vunpack.c.l.b16 %v185
    %v446 = vunpack.c.l.b16 %v186
    %v447 = vunpack.c.l.b16 %v187
    %v448 = vunpack.c.l.b16 %v188
    %v449 = vunpack.c.l.b16 %v189
    %v450 = vunpack.c.l.b16 %v190
    %v451 = vunpack.c.l.b16 %v191
    %v452 = vpack.c.b16 %v325, %v324
    %v453 = vpack.c.b16 %v327, %v326
    %v454 = vpack.c.b16 %v329, %v328
    %v455 = vpack.c.b16 %v331, %v330
    %v456 = vpack.c.b16 %v333, %v332
    %v457 = vpack.c.b16 %v335, %v334
    %v458 = vpack.c.b16 %v337, %v336
    %v459 = vpack.c.b16 %v339, %v338
    %v460 = vpack.c.b16 %v341, %v340
    %v461 = vpack.c.b16 %v343, %v342
    %v462 = vpack.c.b16 %v345, %v344
    %v463 = vpack.c.b16 %v347, %v346
    %v464 = vpack.c.b16 %v349, %v348
    %v465 = vpack.c.b16 %v351, %v350
    %v466 = vpack.c.b16 %v353, %v352
    %v467 = vpack.c.b16 %v355, %v354
    %v468 = vpack.c.b16 %v357, %v356
    %v469 = vpack.c.b16 %v359, %v358
    %v470 = vpack.c.b16 %v361, %v360
    %v471 = vpack.c.b16 %v363, %v362
    %v472 = vpack.c.b16 %v365, %v364
    %v473 = vpack.c.b16 %v367, %v366
    %v474 = vpack.c.b16 %v369, %v368
    %v475 = vpack.c.b16 %v371, %v370
    %v476 = vpack.c.b16 %v373, %v372
    %v477 = vpack.c.b16 %v375, %v374
    %v478 = vpack.c.b16 %v377, %v376
    %v479 = vpack.c.b16 %v379, %v378
    %v480 = vpack.c.b16 %v381, %v380
    %v481 = vpack.c.b16 %v383, %v382
    %v482 = vpack.c.b16 %v385, %v384
    %v483 = vpack.c.b16 %v387, %v386
    %v484 = vpack.c.b16 %v389, %v388
    %v485 = vpack.c.b16 %v391, %v390
    %v486 = vpack.c.b16 %v393, %v392
    %v487 = vpack.c.b16 %v395, %v394
    %v488 = vpack.c.b16 %v397, %v396
    %v489 = vpack.c.b16 %v399, %v398
    %v490 = vpack.c.b16 %v401, %v400
    %v491 = vpack.c.b16 %v403, %v402
    %v492 = vpack.c.b16 %v405, %v404
    %v493 = vpack.c.b16 %v407, %v406
    %v494 = vpack.c.b16 %v409, %v408
    %v495 = vpack.c.b16 %v411, %v410
    %v496 = vpack.c.b16 %v413, %v412
    %v497 = vpack.c.b16 %v415, %v414
    %v498 = vpack.c.b16 %v417, %v416
    %v499 = vpack.c.b16 %v419, %v418
    %v500 = vpack.c.b16 %v421, %v420
    %v501 = vpack.c.b16 %v423, %v422
    %v502 = vpack.c.b16 %v425, %v424
    %v503 = vpack.c.b16 %v427, %v426
    %v504 = vpack.c.b16 %v429, %v428
    %v505 = vpack.c.b16 %v431, %v430
    %v506 = vpack.c.b16 %v433, %v432
    %v507 = vpack.c.b16 %v435, %v434
    %v508 = vpack.c.b16 %v437, %v436
    %v509 = vpack.c.b16 %v439, %v438
    %v510 = vpack.c.b16 %v441, %v440
    %v511 = vpack.c.b16 %v443, %v442
    %v512 = vpack.c.b16 %v445, %v444
    %v513 = vpack.c.b16 %v447, %v446
    %v514 = vpack.c.b16 %v449, %v448
    %v515 = vpack.c.b16 %v451, %v450
    %580 = vmatpush.bf16.msra.mxu0 %v459
    %581 = vmatpush.bf16.msra.mxu0 %v458
    %582 = vmatpush.bf16.msra.mxu0 %v457
    %583 = vmatpush.bf16.msra.mxu0 %v456
    %584 = vmatpush.bf16.msra.mxu0 %v455
    %585 = vmatpush.bf16.msra.mxu0 %v454
    %586 = vmatpush.bf16.msra.mxu0 %v453
    %587 = vmatpush.bf16.msra.mxu0 %v452
    %588 = vmatmul.bf16.gmra.mxu0 %v56
    %v589 = vpop.f32.mrf.mxu0
    %v590 = vadd.f32 %v194, %v589
    %v591 = vpop.f32.mrf.mxu0
    %592 = vdwg.mxu0
    %593 = vmatpush.bf16.msra.mxu0 %v467
    %594 = vmatpush.bf16.msra.mxu0 %v466
    %595 = vmatpush.bf16.msra.mxu0 %v465
    %596 = vmatpush.bf16.msra.mxu0 %v464
    %597 = vmatpush.bf16.msra.mxu0 %v463
    %598 = vmatpush.bf16.msra.mxu0 %v462
    %599 = vmatpush.bf16.msra.mxu0 %v461
    %600 = vmatpush.bf16.msra.mxu0 %v460
    %601 = vmatmul.bf16.gmra.mxu0 %v57
    %v602 = vpop.f32.mrf.mxu0
    %v603 = vadd.f32 %v590, %v602
    %v604 = vpop.f32.mrf.mxu0
    %605 = vdwg.mxu0
    %606 = vmatpush.bf16.msra.mxu0 %v475
    %607 = vmatpush.bf16.msra.mxu0 %v474
    %608 = vmatpush.bf16.msra.mxu0 %v473
    %609 = vmatpush.bf16.msra.mxu0 %v472
    %610 = vmatpush.bf16.msra.mxu0 %v471
    %611 = vmatpush.bf16.msra.mxu0 %v470
    %612 = vmatpush.bf16.msra.mxu0 %v469
    %613 = vmatpush.bf16.msra.mxu0 %v468
    %614 = vmatmul.bf16.gmra.mxu0 %v58
    %v615 = vpop.f32.mrf.mxu0
    %v616 = vadd.f32 %v603, %v615
    %v617 = vpop.f32.mrf.mxu0
    %618 = vdwg.mxu0
    %619 = vmatpush.bf16.msra.mxu0 %v483
    %620 = vmatpush.bf16.msra.mxu0 %v482
    %621 = vmatpush.bf16.msra.mxu0 %v481
    %622 = vmatpush.bf16.msra.mxu0 %v480
    %623 = vmatpush.bf16.msra.mxu0 %v479
    %624 = vmatpush.bf16.msra.mxu0 %v478
    %625 = vmatpush.bf16.msra.mxu0 %v477
    %626 = vmatpush.bf16.msra.mxu0 %v476
    %627 = vmatmul.bf16.gmra.mxu0 %v59
    %v628 = vpop.f32.mrf.mxu0
    %v629 = vadd.f32 %v616, %v628
    %v630 = vpop.f32.mrf.mxu0
    %631 = vdwg.mxu0
    %632 = vmatpush.bf16.msra.mxu0 %v491
    %633 = vmatpush.bf16.msra.mxu0 %v490
    %634 = vmatpush.bf16.msra.mxu0 %v489
    %635 = vmatpush.bf16.msra.mxu0 %v488
    %636 = vmatpush.bf16.msra.mxu0 %v487
    %637 = vmatpush.bf16.msra.mxu0 %v486
    %638 = vmatpush.bf16.msra.mxu0 %v485
    %639 = vmatpush.bf16.msra.mxu0 %v484
    %640 = vmatmul.bf16.gmra.mxu0 %v60
    %v641 = vpop.f32.mrf.mxu0
    %v642 = vadd.f32 %v629, %v641
    %v643 = vpop.f32.mrf.mxu0
    %644 = vdwg.mxu0
    %645 = vmatpush.bf16.msra.mxu0 %v499
    %646 = vmatpush.bf16.msra.mxu0 %v498
    %647 = vmatpush.bf16.msra.mxu0 %v497
    %648 = vmatpush.bf16.msra.mxu0 %v496
    %649 = vmatpush.bf16.msra.mxu0 %v495
    %650 = vmatpush.bf16.msra.mxu0 %v494
    %651 = vmatpush.bf16.msra.mxu0 %v493
    %652 = vmatpush.bf16.msra.mxu0 %v492
    %653 = vmatmul.bf16.gmra.mxu0 %v61
    %v654 = vpop.f32.mrf.mxu0
    %v655 = vadd.f32 %v642, %v654
    %v656 = vpop.f32.mrf.mxu0
    %657 = vdwg.mxu0
    %658 = vmatpush.bf16.msra.mxu0 %v507
    %659 = vmatpush.bf16.msra.mxu0 %v506
    %660 = vmatpush.bf16.msra.mxu0 %v505
    %661 = vmatpush.bf16.msra.mxu0 %v504
    %662 = vmatpush.bf16.msra.mxu0 %v503
    %663 = vmatpush.bf16.msra.mxu0 %v502
    %664 = vmatpush.bf16.msra.mxu0 %v501
    %665 = vmatpush.bf16.msra.mxu0 %v500
    %666 = vmatmul.bf16.gmra.mxu0 %v62
    %v667 = vpop.f32.mrf.mxu0
    %v668 = vadd.f32 %v655, %v667
    %v669 = vpop.f32.mrf.mxu0
    %670 = vdwg.mxu0
    %671 = vmatpush.bf16.msra.mxu0 %v515
    %672 = vmatpush.bf16.msra.mxu0 %v514
    %673 = vmatpush.bf16.msra.mxu0 %v513
    %674 = vmatpush.bf16.msra.mxu0 %v512
    %675 = vmatpush.bf16.msra.mxu0 %v511
    %676 = vmatpush.bf16.msra.mxu0 %v510
    %677 = vmatpush.bf16.msra.mxu0 %v509
    %678 = vmatpush.bf16.msra.mxu0 %v508
    %679 = vmatmul.bf16.gmra.mxu0 %v63
    %v680 = vpop.f32.mrf.mxu0
    %v681 = vadd.f32 %v668, %v680
    %v682 = vpop.f32.mrf.mxu0
    %683 = vdwg.mxu0
    %v684 = vmax.f32 %v681, 0.0
    %v685 = vpack.c.bf16 %v684, %v684
    %v686 = vld [vmem:[%s3] sm:$0xf]
    %v687 = vld [vmem:[%s3 + $0x4] sm:$0xf]
    %v688 = vld [vmem:[%s3 + $0x8] sm:$0xf]
    %v689 = vld [vmem:[%s3 + $0xc] sm:$0xf]
    %v690 = vld [vmem:[%s3 + $0x10] sm:$0xf]
    %v691 = vld [vmem:[%s3 + $0x14] sm:$0xf]
    %v692 = vld [vmem:[%s3 + $0x18] sm:$0xf]
    %v693 = vld [vmem:[%s3 + $0x1c] sm:$0xf]
    %v694 = vld [vmem:[%s3 + $0x20] sm:$0xf]
    %v695 = vld [vmem:[%s3 + $0x24] sm:$0xf]
    %v696 = vld [vmem:[%s3 + $0x28] sm:$0xf]
    %v697 = vld [vmem:[%s3 + $0x2c] sm:$0xf]
    %v698 = vld [vmem:[%s3 + $0x30] sm:$0xf]
    %v699 = vld [vmem:[%s3 + $0x34] sm:$0xf]
    %v700 = vld [vmem:[%s3 + $0x38] sm:$0xf]
    %v701 = vld [vmem:[%s3 + $0x3c] sm:$0xf]
    %v702 = vld [vmem:[%s4] sm:$0x1]
    %v704 = vperm.slane %v702, 0
    %v722 = vunpack.c.l.b16 %v686
    %v723 = vunpack.c.l.b16 %v687
    %v724 = vunpack.c.l.b16 %v688
    %v725 = vunpack.c.l.b16 %v689
    %v726 = vunpack.c.l.b16 %v690
    %v727 = vunpack.c.l.b16 %v691
    %v728 = vunpack.c.l.b16 %v692
    %v729 = vunpack.c.l.b16 %v693
    %v730 = vunpack.c.l.b16 %v694
    %v731 = vunpack.c.l.b16 %v695
    %v732 = vunpack.c.l.b16 %v696
    %v733 = vunpack.c.l.b16 %v697
    %v734 = vunpack.c.l.b16 %v698
    %v735 = vunpack.c.l.b16 %v699
    %v736 = vunpack.c.l.b16 %v700
    %v737 = vunpack.c.l.b16 %v701
    %v738 = vpack.c.b16 %v723, %v722
    %v739 = vpack.c.b16 %v725, %v724
    %v740 = vpack.c.b16 %v727, %v726
    %v741 = vpack.c.b16 %v729, %v728
    %v742 = vpack.c.b16 %v731, %v730
    %v743 = vpack.c.b16 %v733, %v732
    %v744 = vpack.c.b16 %v735, %v734
    %v745 = vpack.c.b16 %v737, %v736
    %754 = vmatpush.bf16.msra.mxu0 %v745
    %755 = vmatpush.bf16.msra.mxu0 %v744
    %756 = vmatpush.bf16.msra.mxu0 %v743
    %757 = vmatpush.bf16.msra.mxu0 %v742
    %758 = vmatpush.bf16.msra.mxu0 %v741
    %759 = vmatpush.bf16.msra.mxu0 %v740
    %760 = vmatpush.bf16.msra.mxu0 %v739
    %761 = vmatpush.bf16.msra.mxu0 %v738
    %762 = vmatmul.bf16.gmra.mxu0 %v685
    %v763 = vpop.f32.mrf.mxu0
    %v764 = vadd.f32 %v704, %v763
    %v765 = vpop.f32.mrf.mxu0
    %766 = vdwg.mxu0
    %v767 = vmax.f32 %v764, 0.0
    %v768 = vpack.c.bf16 %v767, %v767
    %v769 = vld [vmem:[%s5] sm:$0xf]
    %v770 = vld [vmem:[%s5 + $0x4] sm:$0xf]
    %v771 = vld [vmem:[%s5 + $0x8] sm:$0xf]
    %v772 = vld [vmem:[%s5 + $0xc] sm:$0xf]
    %v773 = vld [vmem:[%s5 + $0x10] sm:$0xf]
    %v774 = vld [vmem:[%s5 + $0x14] sm:$0xf]
    %v775 = vld [vmem:[%s5 + $0x18] sm:$0xf]
    %v776 = vld [vmem:[%s5 + $0x1c] sm:$0xf]
    %v777 = vld [vmem:[%s5 + $0x20] sm:$0xf]
    %v778 = vld [vmem:[%s5 + $0x24] sm:$0xf]
    %v779 = vld [vmem:[%s5 + $0x28] sm:$0xf]
    %v780 = vld [vmem:[%s5 + $0x2c] sm:$0xf]
    %v781 = vld [vmem:[%s5 + $0x30] sm:$0xf]
    %v782 = vld [vmem:[%s5 + $0x34] sm:$0xf]
    %v783 = vld [vmem:[%s5 + $0x38] sm:$0xf]
    %v784 = vld [vmem:[%s5 + $0x3c] sm:$0xf]
    %v785 = vld [vmem:[%s6] sm:$0x1]
    %v787 = vperm.slane %v785, 0
    %v805 = vunpack.c.l.b16 %v769
    %v806 = vunpack.c.l.b16 %v770
    %v807 = vunpack.c.l.b16 %v771
    %v808 = vunpack.c.l.b16 %v772
    %v809 = vunpack.c.l.b16 %v773
    %v810 = vunpack.c.l.b16 %v774
    %v811 = vunpack.c.l.b16 %v775
    %v812 = vunpack.c.l.b16 %v776
    %v813 = vunpack.c.l.b16 %v777
    %v814 = vunpack.c.l.b16 %v778
    %v815 = vunpack.c.l.b16 %v779
    %v816 = vunpack.c.l.b16 %v780
    %v817 = vunpack.c.l.b16 %v781
    %v818 = vunpack.c.l.b16 %v782
    %v819 = vunpack.c.l.b16 %v783
    %v820 = vunpack.c.l.b16 %v784
    %v821 = vpack.c.b16 %v806, %v805
    %v822 = vpack.c.b16 %v808, %v807
    %v823 = vpack.c.b16 %v810, %v809
    %v824 = vpack.c.b16 %v812, %v811
    %v825 = vpack.c.b16 %v814, %v813
    %v826 = vpack.c.b16 %v816, %v815
    %v827 = vpack.c.b16 %v818, %v817
    %v828 = vpack.c.b16 %v820, %v819
    %837 = vmatpush.bf16.msra.mxu0 %v828
    %838 = vmatpush.bf16.msra.mxu0 %v827
    %839 = vmatpush.bf16.msra.mxu0 %v826
    %840 = vmatpush.bf16.msra.mxu0 %v825
    %841 = vmatpush.bf16.msra.mxu0 %v824
    %842 = vmatpush.bf16.msra.mxu0 %v823
    %843 = vmatpush.bf16.msra.mxu0 %v822
    %844 = vmatpush.bf16.msra.mxu0 %v821
    %845 = vmatmul.bf16.gmra.mxu0 %v768
    %v846 = vpop.f32.mrf.mxu0
    %v847 = vadd.f32 %v787, %v846
    %v848 = vpop.f32.mrf.mxu0
    %849 = vdwg.mxu0
    %v850 = vmax.f32 %v847, 0.0
    %v851 = vpack.c.bf16 %v850, %v850
    %v852 = vld [vmem:[%s7] sm:$0xf]
    %v853 = vld [vmem:[%s7 + $0x4] sm:$0xf]
    %v854 = vld [vmem:[%s7 + $0x8] sm:$0xf]
    %v855 = vld [vmem:[%s7 + $0xc] sm:$0xf]
    %v856 = vld [vmem:[%s7 + $0x10] sm:$0xf]
    %v857 = vld [vmem:[%s7 + $0x14] sm:$0xf]
    %v858 = vld [vmem:[%s7 + $0x18] sm:$0xf]
    %v859 = vld [vmem:[%s7 + $0x1c] sm:$0xf]
    %v860 = vld [vmem:[%s7 + $0x20] sm:$0xf]
    %v861 = vld [vmem:[%s7 + $0x24] sm:$0xf]
    %v862 = vld [vmem:[%s7 + $0x28] sm:$0xf]
    %v863 = vld [vmem:[%s7 + $0x2c] sm:$0xf]
    %v864 = vld [vmem:[%s7 + $0x30] sm:$0xf]
    %v865 = vld [vmem:[%s7 + $0x34] sm:$0xf]
    %v866 = vld [vmem:[%s7 + $0x38] sm:$0xf]
    %v867 = vld [vmem:[%s7 + $0x3c] sm:$0xf]
    %v868 = vld [vmem:[%s8] sm:$0x1]
    %v870 = vperm.slane %v868, 0
    %v888 = vunpack.c.l.b16 %v852
    %v889 = vunpack.c.l.b16 %v853
    %v890 = vunpack.c.l.b16 %v854
    %v891 = vunpack.c.l.b16 %v855
    %v892 = vunpack.c.l.b16 %v856
    %v893 = vunpack.c.l.b16 %v857
    %v894 = vunpack.c.l.b16 %v858
    %v895 = vunpack.c.l.b16 %v859
    %v896 = vunpack.c.l.b16 %v860
    %v897 = vunpack.c.l.b16 %v861
    %v898 = vunpack.c.l.b16 %v862
    %v899 = vunpack.c.l.b16 %v863
    %v900 = vunpack.c.l.b16 %v864
    %v901 = vunpack.c.l.b16 %v865
    %v902 = vunpack.c.l.b16 %v866
    %v903 = vunpack.c.l.b16 %v867
    %v904 = vpack.c.b16 %v889, %v888
    %v905 = vpack.c.b16 %v891, %v890
    %v906 = vpack.c.b16 %v893, %v892
    %v907 = vpack.c.b16 %v895, %v894
    %v908 = vpack.c.b16 %v897, %v896
    %v909 = vpack.c.b16 %v899, %v898
    %v910 = vpack.c.b16 %v901, %v900
    %v911 = vpack.c.b16 %v903, %v902
    %920 = vmatpush.bf16.msra.mxu0 %v911
    %921 = vmatpush.bf16.msra.mxu0 %v910
    %922 = vmatpush.bf16.msra.mxu0 %v909
    %923 = vmatpush.bf16.msra.mxu0 %v908
    %924 = vmatpush.bf16.msra.mxu0 %v907
    %925 = vmatpush.bf16.msra.mxu0 %v906
    %926 = vmatpush.bf16.msra.mxu0 %v905
    %927 = vmatpush.bf16.msra.mxu0 %v904
    %928 = vmatmul.bf16.gmra.mxu0 %v851
    %v929 = vpop.f32.mrf.mxu0
    %v930 = vadd.f32 %v870, %v929
    %v931 = vpop.f32.mrf.mxu0
    %932 = vdwg.mxu0
    %933 = vst [vmem:[%s9] sm:$0xff] %v930
    // Predicated region
    $region42: #{three_layer_network_forward.1} parent=1 // pred_check
      _
    $region43: #{three_layer_network_forward.1} parent=1 // pred_check_branch
      %935 = sbr.rel (0) target = $region45
    $region44: #{three_layer_network_forward.1} parent=1 // pred_region
      _
    $region45: #{three_layer_network_forward.1} parent=1 // pred_fallthru
      _
    // Predicated region
    $region46: #{three_layer_network_forward.1} parent=1 // pred_check
      _
    $region47: #{three_layer_network_forward.1} parent=1 // pred_check_branch
      %937 = sbr.rel (0) target = $region49
    $region48: #{three_layer_network_forward.1} parent=1 // pred_region
      _
    $region49: #{three_layer_network_forward.1} parent=1 // pred_fallthru
      _
    %938 = vsyncpa [#allocation3], 1

</llo_original>
